<compile_context>
chip_gen: v7x
topology: tpu7x:2x2x1
jax: 0.10.0
libtpu: 0.0.40
codegen_flags: <defaults>
</compile_context>

<pallas_src>
import jax
import jax.numpy as jnp
from jax import lax
from jax.experimental import pallas as pl
from jax.experimental.pallas import tpu as pltpu

_LANE = 128


def _cosine_prob_kernel(ce_ref, xe_ref, o_ref):
    ce = ce_ref[...].astype(jnp.float32)                      # (D, TB)
    xe = xe_ref[...].astype(jnp.float32)                      # (D, TB)
    dot = jnp.sum(ce * xe, axis=0, keepdims=True)             # (1, TB)
    cnorm2 = jnp.sum(ce * ce, axis=0, keepdims=True)          # |center|^2
    xnorm2 = jnp.sum(xe * xe, axis=0, keepdims=True)          # |context|^2
    # clamp on squared product: sqrt(max(a^2*b^2, 1e-16)) == max(a*b, 1e-8)
    inv_denom = lax.rsqrt(jnp.maximum(cnorm2 * xnorm2, 1e-16))
    sim = dot * inv_denom
    o_ref[...] = ((1.0 + sim) * 0.5).astype(o_ref.dtype)


def _round_up(x, m):
    return ((x + m - 1) // m) * m


def word2vec_forward(center_table, context_table, center_idx, context_idx,
                     *, block_b=1024):
    """Returns probability of shape (B,), matching Word2Vec.forward."""
    # Embedding lookup (gather) — parameter glue, kept in plain JAX.
    center_emb = center_table[center_idx]        # (B, D)
    context_emb = context_table[context_idx]     # (B, D)
    B, D = center_emb.shape

    # Lane-dense batch tile: multiple of 128, no larger than the padded batch.
    block_b = max(_LANE, (block_b // _LANE) * _LANE)
    block_b = min(block_b, _round_up(B, _LANE))
    Bp = _round_up(B, block_b)

    # Lane-major layout: (D, Bp), batch on lanes.  Zero-pad the tail columns
    # (zeros -> dot=0, clamped denom -> prob=0.5; no NaN/Inf).
    ce_t = jnp.pad(center_emb.T, ((0, 0), (0, Bp - B)))
    xe_t = jnp.pad(context_emb.T, ((0, 0), (0, Bp - B)))

    out = pl.pallas_call(
        _cosine_prob_kernel,
        out_shape=jax.ShapeDtypeStruct((1, Bp), jnp.float32),
        grid_spec=pltpu.PrefetchScalarGridSpec(
            num_scalar_prefetch=0,
            grid=(Bp // block_b,),
            in_specs=[
                pl.BlockSpec((D, block_b), lambda i: (0, i)),
                pl.BlockSpec((D, block_b), lambda i: (0, i)),
            ],
            out_specs=pl.BlockSpec((1, block_b), lambda i: (0, i)),
        ),
        compiler_params=pltpu.CompilerParams(
            dimension_semantics=("parallel",)),
    )(ce_t, xe_t)
    return out[0, :B]                            # (B,) — matches .squeeze()


if __name__ == "__main__":
    # Small synthetic "vocabulary": V words, embedding_dim D, batch B.
    V, D, B = 16, 32, 8
    key = jax.random.PRNGKey(0)
    k1, k2, k3, k4 = jax.random.split(key, 4)

    # nn.Embedding default init is N(0, 1); weight_tying=False -> two tables.
    center_table = jax.random.normal(k1, (V, D), dtype=jnp.float32)
    context_table = jax.random.normal(k2, (V, D), dtype=jnp.float32)

    center_idx = jax.random.randint(k3, (B,), 0, V, dtype=jnp.int32)
    context_idx = jax.random.randint(k4, (B,), 0, V, dtype=jnp.int32)

    probs = jax.block_until_ready(
        word2vec_forward(center_table, context_table, center_idx, context_idx)
    )

    # Pure-JAX reference mirroring the PyTorch forward exactly.
    ce = center_table[center_idx]
    xe = context_table[context_idx]
    dot = jnp.sum(ce * xe, axis=1)
    denom = jnp.maximum(
        jnp.linalg.norm(ce, axis=1) * jnp.linalg.norm(xe, axis=1), 1e-8
    )
    ref = (1.0 + dot / denom) / 2.0

    assert probs.shape == (B,), probs.shape
    assert jnp.allclose(probs, ref, atol=1e-5, rtol=1e-5), (probs, ref)
    print("KERNEL_OK")
</pallas_src>

<mosaic_0001>
module attributes {stable_mosaic.version = 11 : i64} {
  func.func @_cosine_prob_kernel(%arg0: i32, %arg1: memref<32x128xf32, #tpu.memory_space<vmem>>, %arg2: memref<32x128xf32, #tpu.memory_space<vmem>>, %arg3: memref<1x128xf32, #tpu.memory_space<vmem>>) attributes {dimension_semantics = [#tpu.dimension_semantics<parallel>], iteration_bounds = array<i64: 1>, scalar_prefetch = 0 : i64, scratch_operands = 0 : i64, tpu.core_type = #tpu.core_type<tc>, window_params = [{transform_indices = @transform_0, window_bounds = array<i64: 32, 128>}, {transform_indices = @transform_1, window_bounds = array<i64: 32, 128>}, {transform_indices = @transform_2, window_bounds = array<i64: 1, 128>}]} {
    %c0 = arith.constant 0 : index
    %c0_0 = arith.constant 0 : index
    %0 = vector.load %arg1[%c0, %c0_0] : memref<32x128xf32, #tpu.memory_space<vmem>>, vector<32x128xf32>
    %c0_1 = arith.constant 0 : index
    %c0_2 = arith.constant 0 : index
    %1 = vector.load %arg2[%c0_1, %c0_2] : memref<32x128xf32, #tpu.memory_space<vmem>>, vector<32x128xf32>
    %2 = arith.mulf %0, %1 : vector<32x128xf32>
    %cst = arith.constant dense<0.000000e+00> : vector<128xf32>
    %3 = vector.multi_reduction <add>, %2, %cst [0] : vector<32x128xf32> to vector<128xf32>
    %4 = vector.shape_cast %3 : vector<128xf32> to vector<1x128xf32>
    %5 = arith.mulf %0, %0 : vector<32x128xf32>
    %cst_3 = arith.constant dense<0.000000e+00> : vector<128xf32>
    %6 = vector.multi_reduction <add>, %5, %cst_3 [0] : vector<32x128xf32> to vector<128xf32>
    %7 = vector.shape_cast %6 : vector<128xf32> to vector<1x128xf32>
    %8 = arith.mulf %1, %1 : vector<32x128xf32>
    %cst_4 = arith.constant dense<0.000000e+00> : vector<128xf32>
    %9 = vector.multi_reduction <add>, %8, %cst_4 [0] : vector<32x128xf32> to vector<128xf32>
    %10 = vector.shape_cast %9 : vector<128xf32> to vector<1x128xf32>
    %11 = arith.mulf %7, %10 : vector<1x128xf32>
    %cst_5 = arith.constant 1.000000e-16 : f32
    %12 = vector.broadcast %cst_5 : f32 to vector<1x128xf32>
    %13 = arith.maximumf %11, %12 : vector<1x128xf32>
    %14 = math.rsqrt %13 : vector<1x128xf32>
    %15 = arith.mulf %4, %14 : vector<1x128xf32>
    %cst_6 = arith.constant 1.000000e+00 : f32
    %16 = vector.broadcast %cst_6 : f32 to vector<1x128xf32>
    %17 = arith.addf %16, %15 : vector<1x128xf32>
    %cst_7 = arith.constant 5.000000e-01 : f32
    %18 = vector.broadcast %cst_7 : f32 to vector<1x128xf32>
    %19 = arith.mulf %17, %18 : vector<1x128xf32>
    %c0_8 = arith.constant 0 : index
    %c0_9 = arith.constant 0 : index
    %20 = vector.load %arg3[%c0_8, %c0_9] : memref<1x128xf32, #tpu.memory_space<vmem>>, vector<1x128xf32>
    tpu.vector_store %arg3[%c0_8, %c0_9], %19 {strides = array<i32>} : memref<1x128xf32, #tpu.memory_space<vmem>>, vector<1x128xf32>,
    return
  }
  func.func @transform_0(%arg0: i32) -> (i32, i32) {
    %c0_i32 = arith.constant 0 : i32
    %c0_i32_0 = arith.constant 0 : i32
    return %c0_i32, %arg0 : i32, i32
  }
  func.func @transform_1(%arg0: i32) -> (i32, i32) {
    %c0_i32 = arith.constant 0 : i32
    %c0_i32_0 = arith.constant 0 : i32
    return %c0_i32, %arg0 : i32, i32
  }
  func.func @transform_2(%arg0: i32) -> (i32, i32) {
    %c0_i32 = arith.constant 0 : i32
    %c0_i32_0 = arith.constant 0 : i32
    return %c0_i32, %arg0 : i32, i32
  }
}

</mosaic_0001>

<llo_original>
// kernel: tpu_custom_call.1
$region0: #{tpu_custom_call.1}
  #allocation0 [shape = 'u32[]', space=smem, size = 0x4, offset = 0x4, fixed_abs, tag = 'smem constant byte address 0x4 - core index']
  #allocation1 [shape = 'u32[144,128]{1,0:T(1,128)}', space=vmem, size = 0x12000, scoped, tag = 'internal scratch']
  %s0 = inlined_call_operand.hbm [shape: f32[32,128], index: 0, kind: input, shape index: {}]
  %s1 = inlined_call_operand.hbm [shape: f32[32,128], index: 1, kind: input, shape index: {}]
  %s2 = inlined_call_operand.hbm [shape: f32[1,128], index: 2, kind: output, shape index: {}]
  %s3 = sld [smem:[#allocation0]]
  $region26: #{tpu_custom_call.1} parent=0
    _
  %s5 = ssub.s32 1, %s3
  %s6 = scalar_select 0, %s5, %s3
  $region1: #{tpu_custom_call.1} parent=0
    #allocation2 [shape = 'u8[16384]{0}', space=vmem, size = 0x4000, scoped, tag = 'input window, operand 0, single buffered']
    #allocation3 [shape = 's32[1]{0}', space=sflag, size = 0x4, scoped, tag = 'scoped memory for tpu_custom_call.1']
    #allocation4 [shape = 's32[1]{0}', space=sflag, size = 0x4, scoped, tag = 'scoped memory for tpu_custom_call.1']
    #allocation5 [shape = 'u8[16384]{0}', space=vmem, size = 0x4000, scoped, tag = 'input window, operand 1, single buffered']
    #allocation6 [shape = 's32[1]{0}', space=sflag, size = 0x4, scoped, tag = 'scoped memory for tpu_custom_call.1']
    #allocation7 [shape = 'u8[512]{0}', space=vmem, size = 0x400, scoped, tag = 'output window, operand 0, single buffered']
    %7 = vsyncpa [#allocation3], 0
    %8 = vsyncpa [#allocation6], 0
    %9 = vsyncpa [#allocation4], 0
    // Predicated region
    $region2: #{tpu_custom_call.1} parent=1 // pred_check
      _
    $region3: #{tpu_custom_call.1} parent=1 // pred_check_branch
      %11 = sbr.rel (0) target = $region5
    $region4: #{tpu_custom_call.1} parent=1 // pred_region
      %s13 = ssub.s32 512, 512
      %14 = vsyncadd [#allocation3], %s13
      %s15 = sshll.u32 [#allocation2], 4
      %s16 = int_to_ptr.vmem [resolvable:$true] %s15
      %21 = dma.hbm_to_vmem [thread:$0]  %s0, 512, %s16, [#allocation3], 128, 128, 8
    $region5: #{tpu_custom_call.1} parent=1 // pred_fallthru
      _
    // Predicated region
    $region6: #{tpu_custom_call.1} parent=1 // pred_check
      _
    $region7: #{tpu_custom_call.1} parent=1 // pred_check_branch
      %23 = sbr.rel (0) target = $region9
    $region8: #{tpu_custom_call.1} parent=1 // pred_region
      %s25 = ssub.s32 512, 512
      %26 = vsyncadd [#allocation6], %s25
      %s27 = sshll.u32 [#allocation5], 4
      %s28 = int_to_ptr.vmem [resolvable:$true] %s27
      %33 = dma.hbm_to_vmem [thread:$0]  %s1, 512, %s28, [#allocation6], 128, 128, 8
    $region9: #{tpu_custom_call.1} parent=1 // pred_fallthru
      _
    // Predicated region
    $region10: #{tpu_custom_call.1} parent=1 // pred_check
      _
    $region11: #{tpu_custom_call.1} parent=1 // pred_check_branch
      %35 = sbr.rel (0) target = $region13
    $region12: #{tpu_custom_call.1} parent=1 // pred_region
      %36 = dma.done [#allocation3], 512
    $region13: #{tpu_custom_call.1} parent=1 // pred_fallthru
      _
    // Predicated region
    $region14: #{tpu_custom_call.1} parent=1 // pred_check
      _
    $region15: #{tpu_custom_call.1} parent=1 // pred_check_branch
      %38 = sbr.rel (0) target = $region17
    $region16: #{tpu_custom_call.1} parent=1 // pred_region
      %39 = dma.done [#allocation6], 512
    $region17: #{tpu_custom_call.1} parent=1 // pred_fallthru
      _
    %v40 = vld [vmem:[#allocation2] sm:$0xff]
    %v41 = vld [vmem:[#allocation2 + $0x8] sm:$0xff]
    %v42 = vld [vmem:[#allocation2 + $0x10] sm:$0xff]
    %v43 = vld [vmem:[#allocation2 + $0x18] sm:$0xff]
    %v44 = vld [vmem:[#allocation5] sm:$0xff]
    %v45 = vld [vmem:[#allocation5 + $0x8] sm:$0xff]
    %v46 = vld [vmem:[#allocation5 + $0x10] sm:$0xff]
    %v47 = vld [vmem:[#allocation5 + $0x18] sm:$0xff]
    %v48 = vmul.f32 %v40, %v44
    %v49 = vmul.f32 %v41, %v45
    %v50 = vmul.f32 %v42, %v46
    %v51 = vmul.f32 %v43, %v47
    %v52 = vadd.f32 %v48, %v49
    %v53 = vadd.f32 %v52, %v50
    %v54 = vadd.f32 %v53, %v51
    %v55 = vrot.slane %v54, 4
    %v56 = vadd.f32 %v54, %v55
    %v57 = vrot.slane %v56, 2
    %v58 = vadd.f32 %v56, %v57
    %v59 = vrot.slane %v58, 1
    %v60 = vadd.f32 %v58, %v59
    %v61 = vmul.f32 %v40, %v40
    %v62 = vmul.f32 %v41, %v41
    %v63 = vmul.f32 %v42, %v42
    %v64 = vmul.f32 %v43, %v43
    %v65 = vadd.f32 %v61, %v62
    %v66 = vadd.f32 %v65, %v63
    %v67 = vadd.f32 %v66, %v64
    %v68 = vrot.slane %v67, 4
    %v69 = vadd.f32 %v67, %v68
    %v70 = vrot.slane %v69, 2
    %v71 = vadd.f32 %v69, %v70
    %v72 = vrot.slane %v71, 1
    %v73 = vadd.f32 %v71, %v72
    %v74 = vmul.f32 %v44, %v44
    %v75 = vmul.f32 %v45, %v45
    %v76 = vmul.f32 %v46, %v46
    %v77 = vmul.f32 %v47, %v47
    %v78 = vadd.f32 %v74, %v75
    %v79 = vadd.f32 %v78, %v76
    %v80 = vadd.f32 %v79, %v77
    %v81 = vrot.slane %v80, 4
    %v82 = vadd.f32 %v80, %v81
    %v83 = vrot.slane %v82, 2
    %v84 = vadd.f32 %v82, %v83
    %v85 = vrot.slane %v84, 1
    %v86 = vadd.f32 %v84, %v85
    %v87 = vmul.f32 %v73, %v86
    %v88 = vmax.f32 %v87, 1e-16
    %v89 = vrsqrt.pop %v88
    %v90 = vmul.f32 %v60, %v89
    %v91 = vadd.f32 %v90, 1.0
    %v92 = vmul.f32 %v91, 0.5
    %93 = vst [vmem:[#allocation7] sm:$0x1] %v92
    // Predicated region
    $region18: #{tpu_custom_call.1} parent=1 // pred_check
      _
    $region19: #{tpu_custom_call.1} parent=1 // pred_check_branch
      %95 = sbr.rel (0) target = $region21
    $region20: #{tpu_custom_call.1} parent=1 // pred_region
      %s97 = ssub.s32 16, 16
      %98 = vsyncadd [#allocation4], %s97
      %s100 = sshll.u32 [#allocation7], 4
      %s101 = int_to_ptr.vmem [resolvable:$true] %s100
      %103 = dma.vmem_to_hbm [thread:$0]  %s101, 16, %s2, [#allocation4]
    $region21: #{tpu_custom_call.1} parent=1 // pred_fallthru
      _
    // Predicated region
    $region22: #{tpu_custom_call.1} parent=1 // pred_check
      _
    $region23: #{tpu_custom_call.1} parent=1 // pred_check_branch
      %105 = sbr.rel (0) target = $region25
    $region24: #{tpu_custom_call.1} parent=1 // pred_region
      %106 = dma.done [#allocation4], 16
    $region25: #{tpu_custom_call.1} parent=1 // pred_fallthru
      _
    %107 = vsyncpa [#allocation3], 1
    %108 = vsyncpa [#allocation6], 1
    %109 = vsyncpa [#allocation4], 1

</llo_original>
